<compile_context>
chip_gen: v6e
topology: v6e:2x2x1
jax: 0.10.0
libtpu: 0.0.40
codegen_flags: <defaults>
</compile_context>

<pallas_src>
import functools

import numpy as np
import jax
import jax.numpy as jnp
from jax.experimental import pallas as pl
from jax.experimental.pallas import tpu as pltpu

N = 4                 # model's n
NQ = N + 1            # total qubits (incl. ancilla)
DIM = 2 ** NQ         # 32
FLAT = DIM * DIM      # 1024


# ----------------------------------------------------------------------------
# Plain-numpy glue: build the fixed circuit unitaries U1 (cir1) and U2 (cir2).
# Parameters are initialised deterministically in-script.
# ----------------------------------------------------------------------------
def _ry(theta):
    c, s = np.cos(theta / 2.0), np.sin(theta / 2.0)
    return np.array([[c, -s], [s, c]], dtype=np.complex64)


def _rx(theta):
    c, s = np.cos(theta / 2.0), np.sin(theta / 2.0)
    return np.array([[c, -1j * s], [-1j * s, c]], dtype=np.complex64)


def _embed(gate2, q):
    """Single-qubit gate on qubit q of NQ (qubit 0 = MSB)."""
    op = np.array([[1.0]], dtype=np.complex64)
    for k in range(NQ):
        op = np.kron(op, gate2 if k == q else np.eye(2, dtype=np.complex64))
    return op


def _cnot(ctrl, tgt):
    P = np.zeros((DIM, DIM), dtype=np.complex64)
    for idx in range(DIM):
        bits = [(idx >> (NQ - 1 - k)) & 1 for k in range(NQ)]
        if bits[ctrl]:
            bits[tgt] ^= 1
        j = 0
        for b in bits:
            j = (j << 1) | b
        P[j, idx] = 1.0
    return P


class CircuitBuilder:
    """Accumulates gate matrices in application order: U_total = G_last @ ... @ G_first."""

    def __init__(self, theta_offset=0.0):
        self.U = np.eye(DIM, dtype=np.complex64)
        self._pcount = 0
        self._off = theta_offset

    def _theta(self):
        self._pcount += 1
        return self._off + 0.1 * self._pcount   # deterministic "parameter init"

    def _apply(self, G):
        self.U = (G @ self.U).astype(np.complex64)

    def rylayer(self, wires=None):
        for q in (wires if wires is not None else range(NQ)):
            self._apply(_embed(_ry(self._theta()), q))

    def rxlayer(self, wires=None):
        for q in (wires if wires is not None else range(NQ)):
            self._apply(_embed(_rx(self._theta()), q))

    def cnot(self, c, t):
        self._apply(_cnot(c, t))

    def barrier(self):
        pass


def build_circuit1():
    c = CircuitBuilder(theta_offset=0.0)
    for ctrl in range(NQ):                       # 5 blocks
        c.rylayer()
        c.rxlayer()
        for tgt in range(NQ):
            if tgt != ctrl:
                c.cnot(ctrl, tgt)
        c.barrier()
    return c.U


def build_circuit2():
    ulist = [0, 1, 2, 3]
    c = CircuitBuilder(theta_offset=1.0)
    for ctrl in ulist:                           # 4 blocks
        c.rylayer(ulist)
        c.rxlayer(ulist)
        for tgt in ulist:
            if tgt != ctrl:
                c.cnot(ctrl, tgt)
        c.barrier()
    return c.U


def build_readout_matrix(U1, U2):
    """Precompute W (2*FLAT, 4) so that for O_cat = [O_re.flat | O_im.flat] (len 2048):

         S = O_cat @ W  =  [Re(s0), Re(s1), Im(s0), Im(s1)]

       where s = U2[0:2, :] @ O @ (U1 |0>).  Then x = sum(S**2)."""
    psi = U1[:, 0]                                   # (32,) complex
    R = U2[0:2, :]                                   # (2, 32) complex
    # G_j[k, l] = R[j, k] * psi[l];   s_j = sum_{k,l} O[k, l] * G_j[k, l]
    G = R[:, :, None] * psi[None, None, :]           # (2, 32, 32)
    G_flat = np.ascontiguousarray(G.reshape(2, FLAT).T)   # (1024, 2), row-major match
    g_re = G_flat.real.astype(np.float32)
    g_im = G_flat.imag.astype(np.float32)
    W = np.zeros((2 * FLAT, 4), dtype=np.float32)
    W[:FLAT, 0:2] = g_re          # contributes O_re @ G_re   -> Re(s)
    W[FLAT:, 0:2] = -g_im         # contributes -O_im @ G_im  -> Re(s)
    W[:FLAT, 2:4] = g_im          # contributes O_re @ G_im   -> Im(s)
    W[FLAT:, 2:4] = g_re          # contributes O_im @ G_re   -> Im(s)
    return W


# ----------------------------------------------------------------------------
# Pallas kernel: one batched matmul + square/reduce + single lane-dense store.
# ----------------------------------------------------------------------------
def _dj_kernel(oc_ref, w_ref, out_ref):
    # (Bblk, 2048) @ (2048, 4) -> (Bblk, 4) = [Re(s0), Re(s1), Im(s0), Im(s1)]
    s = jnp.dot(oc_ref[...], w_ref[...], preferred_element_type=jnp.float32)
    x = jnp.sum(s * s, axis=1, keepdims=True)            # (Bblk, 1) = |s0|^2 + |s1|^2
    col = jax.lax.broadcasted_iota(jnp.int32, out_ref.shape, 1)
    out_ref[...] = jnp.where(col == 0, x, 1.0 - x)       # single (Bblk, 2) store


@jax.jit
def net_forward(o_re, o_im, w):
    """o_re, o_im: (B, 32, 32) float32 real/imag oracle planes.  w: (2048, 4) float32."""
    batch = o_re.shape[0]
    o_cat = jnp.concatenate(
        [o_re.reshape(batch, FLAT), o_im.reshape(batch, FLAT)], axis=1)   # (B, 2048)

    # Batch tiling: block is a multiple of 8 (sublane), capped at 512 rows
    # (512 * 8 KiB = 4 MiB/block, double-buffered 8 MiB -> fits scoped VMEM on all gens).
    bblk = min(512, max(8, -(-batch // 8) * 8))
    bp = -(-batch // bblk) * bblk
    if bp != batch:
        o_cat = jnp.pad(o_cat, ((0, bp - batch), (0, 0)))

    out = pl.pallas_call(
        _dj_kernel,
        out_shape=jax.ShapeDtypeStruct((bp, 2), jnp.float32),
        grid_spec=pltpu.PrefetchScalarGridSpec(
            num_scalar_prefetch=0,
            grid=(bp // bblk,),
            in_specs=[
                pl.BlockSpec((bblk, 2 * FLAT), lambda i: (i, 0)),   # oracle rows (streamed)
                pl.BlockSpec((2 * FLAT, 4), lambda i: (0, 0)),      # W (stays resident)
            ],
            out_specs=pl.BlockSpec((bblk, 2), lambda i: (i, 0)),
        ),
        compiler_params=pltpu.CompilerParams(
            dimension_semantics=("parallel",)),
    )(o_cat, w)
    return out[:batch]


# ----------------------------------------------------------------------------
# Example inputs: Deutsch–Jozsa oracles |x>|y> -> |x>|y ^ f(x)> (qubit 4 = ancilla).
# ----------------------------------------------------------------------------
def dj_oracle(f_vals):
    O = np.zeros((DIM, DIM), dtype=np.complex64)
    for idx in range(DIM):
        x = idx >> 1
        y = idx & 1
        new_idx = (x << 1) | (y ^ int(f_vals[x]))
        O[new_idx, idx] = 1.0
    return O


if __name__ == "__main__":
    # Fixed circuit unitaries, intermediate state psi1 = U1 |0...0>, and readout matrix.
    U1 = build_circuit1()
    U2 = build_circuit2()
    psi1 = U1[:, 0:1]                      # (D, 1) complex64
    W = jnp.asarray(build_readout_matrix(U1, U2))          # (2048, 4) float32

    # Deterministic oracle batch (batch = 2): one constant, one balanced function,
    # the balanced half chosen with jax.random.PRNGKey(0).
    key = jax.random.PRNGKey(0)
    perm = np.asarray(jax.random.permutation(key, 2 ** N))
    f_const = np.zeros(2 ** N, dtype=np.int32)
    f_balanced = np.zeros(2 ** N, dtype=np.int32)
    f_balanced[perm[: 2 ** (N - 1)]] = 1
    oracles = np.stack([dj_oracle(f_const), dj_oracle(f_balanced)])   # (2, 32, 32) complex

    # Split complex oracles into real/imag float32 planes for the TPU kernel.
    o_re = jnp.asarray(oracles.real, dtype=jnp.float32)
    o_im = jnp.asarray(oracles.imag, dtype=jnp.float32)

    logits = net_forward(o_re, o_im, W)
    logits = jax.block_until_ready(logits)

    # Pure-numpy reference of the same forward pass (full U2, no algebraic shortcut).
    ref = []
    for O in oracles:
        s = U2 @ (O @ psi1)
        x = float(np.abs(s[0, 0]) ** 2 + np.abs(s[1, 0]) ** 2)
        ref.append([x, 1.0 - x])
    ref = np.asarray(ref, dtype=np.float32)

    np.testing.assert_allclose(np.asarray(logits), ref, atol=1e-4, rtol=1e-4)
    # TODO(synk): the PyTorch forward also returns the QubitCircuit object `cir`; it has
    # no array equivalent and is omitted.
    print("KERNEL_OK")
</pallas_src>

<mosaic_0001>
module attributes {stable_mosaic.version = 11 : i64} {
  func.func @_dj_kernel(%arg0: i32, %arg1: memref<8x2048xf32, #tpu.memory_space<vmem>>, %arg2: memref<2048x4xf32, #tpu.memory_space<vmem>>, %arg3: memref<8x2xf32, #tpu.memory_space<vmem>>) attributes {dimension_semantics = [#tpu.dimension_semantics<parallel>], iteration_bounds = array<i64: 1>, scalar_prefetch = 0 : i64, scratch_operands = 0 : i64, tpu.core_type = #tpu.core_type<tc>, window_params = [{transform_indices = @transform_0, window_bounds = array<i64: 8, 2048>}, {pipeline_mode = #tpu.pipeline_mode<synchronous>, transform_indices = @transform_1, window_bounds = array<i64: 2048, 4>}, {transform_indices = @transform_2, window_bounds = array<i64: 8, 2>}]} {
    %c0 = arith.constant 0 : index
    %c0_0 = arith.constant 0 : index
    %0 = vector.load %arg1[%c0, %c0_0] : memref<8x2048xf32, #tpu.memory_space<vmem>>, vector<8x2048xf32>
    %c0_1 = arith.constant 0 : index
    %c0_2 = arith.constant 0 : index
    %1 = vector.load %arg2[%c0_1, %c0_2] : memref<2048x4xf32, #tpu.memory_space<vmem>>, vector<2048x4xf32>
    %cst = arith.constant dense<0.000000e+00> : vector<8x4xf32>
    %2 = tpu.matmul %0, %1, %cst {dimension_numbers = #tpu.dot_dimension_numbers<[1], [0], [0], [1], [0, 0, 1, 1], [], []>} : vector<8x2048xf32>, vector<2048x4xf32>, vector<8x4xf32> -> vector<8x4xf32>
    %3 = arith.mulf %2, %2 : vector<8x4xf32>
    %cst_3 = arith.constant dense<0.000000e+00> : vector<8xf32>
    %4 = vector.multi_reduction <add>, %3, %cst_3 [1] : vector<8x4xf32> to vector<8xf32>
    %5 = vector.shape_cast %4 : vector<8xf32> to vector<8x1xf32>
    %6 = tpu.iota {dimensions = array<i32: 1>} : vector<8x2xi32>
    %c0_i32 = arith.constant 0 : i32
    %7 = vector.broadcast %c0_i32 : i32 to vector<8x2xi32>
    %8 = arith.cmpi eq, %6, %7 : vector<8x2xi32>
    %cst_4 = arith.constant 1.000000e+00 : f32
    %9 = vector.broadcast %cst_4 : f32 to vector<8x1xf32>
    %10 = arith.subf %9, %5 : vector<8x1xf32>
    %11 = vector.shape_cast %5 : vector<8x1xf32> to vector<8x1xf32>
    %12 = vector.broadcast %11 : vector<8x1xf32> to vector<8x2xf32>
    %13 = vector.shape_cast %10 : vector<8x1xf32> to vector<8x1xf32>
    %14 = vector.broadcast %13 : vector<8x1xf32> to vector<8x2xf32>
    %15 = arith.select %8, %12, %14 : vector<8x2xi1>, vector<8x2xf32>
    %c0_5 = arith.constant 0 : index
    %c0_6 = arith.constant 0 : index
    %16 = vector.load %arg3[%c0_5, %c0_6] : memref<8x2xf32, #tpu.memory_space<vmem>>, vector<8x2xf32>
    tpu.vector_store %arg3[%c0_5, %c0_6], %15 {strides = array<i32>} : memref<8x2xf32, #tpu.memory_space<vmem>>, vector<8x2xf32>,
    return
  }
  func.func @transform_0(%arg0: i32) -> (i32, i32) {
    %c0_i32 = arith.constant 0 : i32
    %c0_i32_0 = arith.constant 0 : i32
    return %arg0, %c0_i32 : i32, i32
  }
  func.func @transform_1(%arg0: i32) -> (i32, i32) {
    %c0_i32 = arith.constant 0 : i32
    %c0_i32_0 = arith.constant 0 : i32
    %c0_i32_1 = arith.constant 0 : i32
    return %c0_i32, %c0_i32_0 : i32, i32
  }
  func.func @transform_2(%arg0: i32) -> (i32, i32) {
    %c0_i32 = arith.constant 0 : i32
    %c0_i32_0 = arith.constant 0 : i32
    return %arg0, %c0_i32 : i32, i32
  }
}

</mosaic_0001>

<llo_original>
// kernel: net_forward.1
$region0: #{net_forward.1}
  #allocation0 [shape = 'u32[]', space=smem, size = 0x4, offset = 0x4, fixed_abs, tag = 'smem constant byte address 0x4 - core index']
  #allocation1 [shape = 'u32[144,128]{1,0:T(1,128)}', space=vmem, size = 0x12000, scoped, tag = 'internal scratch']
  %s0 = inlined_call_operand.vmem [shape: f32[8,2048], index: 0, kind: input, shape index: {}]
  %s1 = inlined_call_operand.vmem [shape: f32[2048,4], index: 1, kind: input, shape index: {}]
  %s2 = inlined_call_operand.vmem [shape: f32[8,2], index: 2, kind: output, shape index: {}]
  %s3 = sld [smem:[#allocation0]]
  $region18: #{net_forward.1} parent=0
    _
  %s5 = ssub.s32 1, %s3
  %s6 = scalar_select 0, %s5, %s3
  // Predicated region
  $region2: #{net_forward.1} parent=0 // pred_check
    _
  $region3: #{net_forward.1} parent=0 // pred_check_branch
    %8 = sbr.rel (0) target = $region5
  $region4: #{net_forward.1} parent=0 // pred_region
    _
  $region5: #{net_forward.1} parent=0 // pred_fallthru
    _
  // Predicated region
  $region6: #{net_forward.1} parent=0 // pred_check
    _
  $region7: #{net_forward.1} parent=0 // pred_check_branch
    %10 = sbr.rel (0) target = $region9
  $region8: #{net_forward.1} parent=0 // pred_region
    _
  $region9: #{net_forward.1} parent=0 // pred_fallthru
    _
  %v11 = vld [vmem:[%s0] sm:$0xff]
  %v12 = vld [vmem:[%s0 + $0x8] sm:$0xff]
  %v13 = vld [vmem:[%s0 + $0x10] sm:$0xff]
  %v14 = vld [vmem:[%s0 + $0x18] sm:$0xff]
  %v15 = vld [vmem:[%s0 + $0x20] sm:$0xff]
  %v16 = vld [vmem:[%s0 + $0x28] sm:$0xff]
  %v17 = vld [vmem:[%s0 + $0x30] sm:$0xff]
  %v18 = vld [vmem:[%s0 + $0x38] sm:$0xff]
  %v19 = vld [vmem:[%s0 + $0x40] sm:$0xff]
  %v20 = vld [vmem:[%s0 + $0x48] sm:$0xff]
  %v21 = vld [vmem:[%s0 + $0x50] sm:$0xff]
  %v22 = vld [vmem:[%s0 + $0x58] sm:$0xff]
  %v23 = vld [vmem:[%s0 + $0x60] sm:$0xff]
  %v24 = vld [vmem:[%s0 + $0x68] sm:$0xff]
  %v25 = vld [vmem:[%s0 + $0x70] sm:$0xff]
  %v26 = vld [vmem:[%s0 + $0x78] sm:$0xff]
  %v27 = vld [vmem:[%s1] sm:$0xff]
  %v28 = vld [vmem:[%s1 + $0x8] sm:$0xff]
  %v29 = vld [vmem:[%s1 + $0x10] sm:$0xff]
  %v30 = vld [vmem:[%s1 + $0x18] sm:$0xff]
  %v31 = vld [vmem:[%s1 + $0x20] sm:$0xff]
  %v32 = vld [vmem:[%s1 + $0x28] sm:$0xff]
  %v33 = vld [vmem:[%s1 + $0x30] sm:$0xff]
  %v34 = vld [vmem:[%s1 + $0x38] sm:$0xff]
  %v35 = vld [vmem:[%s1 + $0x40] sm:$0xff]
  %v36 = vld [vmem:[%s1 + $0x48] sm:$0xff]
  %v37 = vld [vmem:[%s1 + $0x50] sm:$0xff]
  %v38 = vld [vmem:[%s1 + $0x58] sm:$0xff]
  %v39 = vld [vmem:[%s1 + $0x60] sm:$0xff]
  %v40 = vld [vmem:[%s1 + $0x68] sm:$0xff]
  %v41 = vld [vmem:[%s1 + $0x70] sm:$0xff]
  %v42 = vld [vmem:[%s1 + $0x78] sm:$0xff]
  %v43 = vld [vmem:[%s1 + $0x80] sm:$0xff]
  %v44 = vld [vmem:[%s1 + $0x88] sm:$0xff]
  %v45 = vld [vmem:[%s1 + $0x90] sm:$0xff]
  %v46 = vld [vmem:[%s1 + $0x98] sm:$0xff]
  %v47 = vld [vmem:[%s1 + $0xa0] sm:$0xff]
  %v48 = vld [vmem:[%s1 + $0xa8] sm:$0xff]
  %v49 = vld [vmem:[%s1 + $0xb0] sm:$0xff]
  %v50 = vld [vmem:[%s1 + $0xb8] sm:$0xff]
  %v51 = vld [vmem:[%s1 + $0xc0] sm:$0xff]
  %v52 = vld [vmem:[%s1 + $0xc8] sm:$0xff]
  %v53 = vld [vmem:[%s1 + $0xd0] sm:$0xff]
  %v54 = vld [vmem:[%s1 + $0xd8] sm:$0xff]
  %v55 = vld [vmem:[%s1 + $0xe0] sm:$0xff]
  %v56 = vld [vmem:[%s1 + $0xe8] sm:$0xff]
  %v57 = vld [vmem:[%s1 + $0xf0] sm:$0xff]
  %v58 = vld [vmem:[%s1 + $0xf8] sm:$0xff]
  %v59 = vld [vmem:[%s1 + $0x100] sm:$0xff]
  %v60 = vld [vmem:[%s1 + $0x108] sm:$0xff]
  %v61 = vld [vmem:[%s1 + $0x110] sm:$0xff]
  %v62 = vld [vmem:[%s1 + $0x118] sm:$0xff]
  %v63 = vld [vmem:[%s1 + $0x120] sm:$0xff]
  %v64 = vld [vmem:[%s1 + $0x128] sm:$0xff]
  %v65 = vld [vmem:[%s1 + $0x130] sm:$0xff]
  %v66 = vld [vmem:[%s1 + $0x138] sm:$0xff]
  %v67 = vld [vmem:[%s1 + $0x140] sm:$0xff]
  %v68 = vld [vmem:[%s1 + $0x148] sm:$0xff]
  %v69 = vld [vmem:[%s1 + $0x150] sm:$0xff]
  %v70 = vld [vmem:[%s1 + $0x158] sm:$0xff]
  %v71 = vld [vmem:[%s1 + $0x160] sm:$0xff]
  %v72 = vld [vmem:[%s1 + $0x168] sm:$0xff]
  %v73 = vld [vmem:[%s1 + $0x170] sm:$0xff]
  %v74 = vld [vmem:[%s1 + $0x178] sm:$0xff]
  %v75 = vld [vmem:[%s1 + $0x180] sm:$0xff]
  %v76 = vld [vmem:[%s1 + $0x188] sm:$0xff]
  %v77 = vld [vmem:[%s1 + $0x190] sm:$0xff]
  %v78 = vld [vmem:[%s1 + $0x198] sm:$0xff]
  %v79 = vld [vmem:[%s1 + $0x1a0] sm:$0xff]
  %v80 = vld [vmem:[%s1 + $0x1a8] sm:$0xff]
  %v81 = vld [vmem:[%s1 + $0x1b0] sm:$0xff]
  %v82 = vld [vmem:[%s1 + $0x1b8] sm:$0xff]
  %v83 = vld [vmem:[%s1 + $0x1c0] sm:$0xff]
  %v84 = vld [vmem:[%s1 + $0x1c8] sm:$0xff]
  %v85 = vld [vmem:[%s1 + $0x1d0] sm:$0xff]
  %v86 = vld [vmem:[%s1 + $0x1d8] sm:$0xff]
  %v87 = vld [vmem:[%s1 + $0x1e0] sm:$0xff]
  %v88 = vld [vmem:[%s1 + $0x1e8] sm:$0xff]
  %v89 = vld [vmem:[%s1 + $0x1f0] sm:$0xff]
  %v90 = vld [vmem:[%s1 + $0x1f8] sm:$0xff]
  %v91 = vld [vmem:[%s1 + $0x200] sm:$0xff]
  %v92 = vld [vmem:[%s1 + $0x208] sm:$0xff]
  %v93 = vld [vmem:[%s1 + $0x210] sm:$0xff]
  %v94 = vld [vmem:[%s1 + $0x218] sm:$0xff]
  %v95 = vld [vmem:[%s1 + $0x220] sm:$0xff]
  %v96 = vld [vmem:[%s1 + $0x228] sm:$0xff]
  %v97 = vld [vmem:[%s1 + $0x230] sm:$0xff]
  %v98 = vld [vmem:[%s1 + $0x238] sm:$0xff]
  %v99 = vld [vmem:[%s1 + $0x240] sm:$0xff]
  %v100 = vld [vmem:[%s1 + $0x248] sm:$0xff]
  %v101 = vld [vmem:[%s1 + $0x250] sm:$0xff]
  %v102 = vld [vmem:[%s1 + $0x258] sm:$0xff]
  %v103 = vld [vmem:[%s1 + $0x260] sm:$0xff]
  %v104 = vld [vmem:[%s1 + $0x268] sm:$0xff]
  %v105 = vld [vmem:[%s1 + $0x270] sm:$0xff]
  %v106 = vld [vmem:[%s1 + $0x278] sm:$0xff]
  %v107 = vld [vmem:[%s1 + $0x280] sm:$0xff]
  %v108 = vld [vmem:[%s1 + $0x288] sm:$0xff]
  %v109 = vld [vmem:[%s1 + $0x290] sm:$0xff]
  %v110 = vld [vmem:[%s1 + $0x298] sm:$0xff]
  %v111 = vld [vmem:[%s1 + $0x2a0] sm:$0xff]
  %v112 = vld [vmem:[%s1 + $0x2a8] sm:$0xff]
  %v113 = vld [vmem:[%s1 + $0x2b0] sm:$0xff]
  %v114 = vld [vmem:[%s1 + $0x2b8] sm:$0xff]
  %v115 = vld [vmem:[%s1 + $0x2c0] sm:$0xff]
  %v116 = vld [vmem:[%s1 + $0x2c8] sm:$0xff]
  %v117 = vld [vmem:[%s1 + $0x2d0] sm:$0xff]
  %v118 = vld [vmem:[%s1 + $0x2d8] sm:$0xff]
  %v119 = vld [vmem:[%s1 + $0x2e0] sm:$0xff]
  %v120 = vld [vmem:[%s1 + $0x2e8] sm:$0xff]
  %v121 = vld [vmem:[%s1 + $0x2f0] sm:$0xff]
  %v122 = vld [vmem:[%s1 + $0x2f8] sm:$0xff]
  %v123 = vld [vmem:[%s1 + $0x300] sm:$0xff]
  %v124 = vld [vmem:[%s1 + $0x308] sm:$0xff]
  %v125 = vld [vmem:[%s1 + $0x310] sm:$0xff]
  %v126 = vld [vmem:[%s1 + $0x318] sm:$0xff]
  %v127 = vld [vmem:[%s1 + $0x320] sm:$0xff]
  %v128 = vld [vmem:[%s1 + $0x328] sm:$0xff]
  %v129 = vld [vmem:[%s1 + $0x330] sm:$0xff]
  %v130 = vld [vmem:[%s1 + $0x338] sm:$0xff]
  %v131 = vld [vmem:[%s1 + $0x340] sm:$0xff]
  %v132 = vld [vmem:[%s1 + $0x348] sm:$0xff]
  %v133 = vld [vmem:[%s1 + $0x350] sm:$0xff]
  %v134 = vld [vmem:[%s1 + $0x358] sm:$0xff]
  %v135 = vld [vmem:[%s1 + $0x360] sm:$0xff]
  %v136 = vld [vmem:[%s1 + $0x368] sm:$0xff]
  %v137 = vld [vmem:[%s1 + $0x370] sm:$0xff]
  %v138 = vld [vmem:[%s1 + $0x378] sm:$0xff]
  %v139 = vld [vmem:[%s1 + $0x380] sm:$0xff]
  %v140 = vld [vmem:[%s1 + $0x388] sm:$0xff]
  %v141 = vld [vmem:[%s1 + $0x390] sm:$0xff]
  %v142 = vld [vmem:[%s1 + $0x398] sm:$0xff]
  %v143 = vld [vmem:[%s1 + $0x3a0] sm:$0xff]
  %v144 = vld [vmem:[%s1 + $0x3a8] sm:$0xff]
  %v145 = vld [vmem:[%s1 + $0x3b0] sm:$0xff]
  %v146 = vld [vmem:[%s1 + $0x3b8] sm:$0xff]
  %v147 = vld [vmem:[%s1 + $0x3c0] sm:$0xff]
  %v148 = vld [vmem:[%s1 + $0x3c8] sm:$0xff]
  %v149 = vld [vmem:[%s1 + $0x3d0] sm:$0xff]
  %v150 = vld [vmem:[%s1 + $0x3d8] sm:$0xff]
  %v151 = vld [vmem:[%s1 + $0x3e0] sm:$0xff]
  %v152 = vld [vmem:[%s1 + $0x3e8] sm:$0xff]
  %v153 = vld [vmem:[%s1 + $0x3f0] sm:$0xff]
  %v154 = vld [vmem:[%s1 + $0x3f8] sm:$0xff]
  %v155 = vld [vmem:[%s1 + $0x400] sm:$0xff]
  %v156 = vld [vmem:[%s1 + $0x408] sm:$0xff]
  %v157 = vld [vmem:[%s1 + $0x410] sm:$0xff]
  %v158 = vld [vmem:[%s1 + $0x418] sm:$0xff]
  %v159 = vld [vmem:[%s1 + $0x420] sm:$0xff]
  %v160 = vld [vmem:[%s1 + $0x428] sm:$0xff]
  %v161 = vld [vmem:[%s1 + $0x430] sm:$0xff]
  %v162 = vld [vmem:[%s1 + $0x438] sm:$0xff]
  %v163 = vld [vmem:[%s1 + $0x440] sm:$0xff]
  %v164 = vld [vmem:[%s1 + $0x448] sm:$0xff]
  %v165 = vld [vmem:[%s1 + $0x450] sm:$0xff]
  %v166 = vld [vmem:[%s1 + $0x458] sm:$0xff]
  %v167 = vld [vmem:[%s1 + $0x460] sm:$0xff]
  %v168 = vld [vmem:[%s1 + $0x468] sm:$0xff]
  %v169 = vld [vmem:[%s1 + $0x470] sm:$0xff]
  %v170 = vld [vmem:[%s1 + $0x478] sm:$0xff]
  %v171 = vld [vmem:[%s1 + $0x480] sm:$0xff]
  %v172 = vld [vmem:[%s1 + $0x488] sm:$0xff]
  %v173 = vld [vmem:[%s1 + $0x490] sm:$0xff]
  %v174 = vld [vmem:[%s1 + $0x498] sm:$0xff]
  %v175 = vld [vmem:[%s1 + $0x4a0] sm:$0xff]
  %v176 = vld [vmem:[%s1 + $0x4a8] sm:$0xff]
  %v177 = vld [vmem:[%s1 + $0x4b0] sm:$0xff]
  %v178 = vld [vmem:[%s1 + $0x4b8] sm:$0xff]
  %v179 = vld [vmem:[%s1 + $0x4c0] sm:$0xff]
  %v180 = vld [vmem:[%s1 + $0x4c8] sm:$0xff]
  %v181 = vld [vmem:[%s1 + $0x4d0] sm:$0xff]
  %v182 = vld [vmem:[%s1 + $0x4d8] sm:$0xff]
  %v183 = vld [vmem:[%s1 + $0x4e0] sm:$0xff]
  %v184 = vld [vmem:[%s1 + $0x4e8] sm:$0xff]
  %v185 = vld [vmem:[%s1 + $0x4f0] sm:$0xff]
  %v186 = vld [vmem:[%s1 + $0x4f8] sm:$0xff]
  %v187 = vld [vmem:[%s1 + $0x500] sm:$0xff]
  %v188 = vld [vmem:[%s1 + $0x508] sm:$0xff]
  %v189 = vld [vmem:[%s1 + $0x510] sm:$0xff]
  %v190 = vld [vmem:[%s1 + $0x518] sm:$0xff]
  %v191 = vld [vmem:[%s1 + $0x520] sm:$0xff]
  %v192 = vld [vmem:[%s1 + $0x528] sm:$0xff]
  %v193 = vld [vmem:[%s1 + $0x530] sm:$0xff]
  %v194 = vld [vmem:[%s1 + $0x538] sm:$0xff]
  %v195 = vld [vmem:[%s1 + $0x540] sm:$0xff]
  %v196 = vld [vmem:[%s1 + $0x548] sm:$0xff]
  %v197 = vld [vmem:[%s1 + $0x550] sm:$0xff]
  %v198 = vld [vmem:[%s1 + $0x558] sm:$0xff]
  %v199 = vld [vmem:[%s1 + $0x560] sm:$0xff]
  %v200 = vld [vmem:[%s1 + $0x568] sm:$0xff]
  %v201 = vld [vmem:[%s1 + $0x570] sm:$0xff]
  %v202 = vld [vmem:[%s1 + $0x578] sm:$0xff]
  %v203 = vld [vmem:[%s1 + $0x580] sm:$0xff]
  %v204 = vld [vmem:[%s1 + $0x588] sm:$0xff]
  %v205 = vld [vmem:[%s1 + $0x590] sm:$0xff]
  %v206 = vld [vmem:[%s1 + $0x598] sm:$0xff]
  %v207 = vld [vmem:[%s1 + $0x5a0] sm:$0xff]
  %v208 = vld [vmem:[%s1 + $0x5a8] sm:$0xff]
  %v209 = vld [vmem:[%s1 + $0x5b0] sm:$0xff]
  %v210 = vld [vmem:[%s1 + $0x5b8] sm:$0xff]
  %v211 = vld [vmem:[%s1 + $0x5c0] sm:$0xff]
  %v212 = vld [vmem:[%s1 + $0x5c8] sm:$0xff]
  %v213 = vld [vmem:[%s1 + $0x5d0] sm:$0xff]
  %v214 = vld [vmem:[%s1 + $0x5d8] sm:$0xff]
  %v215 = vld [vmem:[%s1 + $0x5e0] sm:$0xff]
  %v216 = vld [vmem:[%s1 + $0x5e8] sm:$0xff]
  %v217 = vld [vmem:[%s1 + $0x5f0] sm:$0xff]
  %v218 = vld [vmem:[%s1 + $0x5f8] sm:$0xff]
  %v219 = vld [vmem:[%s1 + $0x600] sm:$0xff]
  %v220 = vld [vmem:[%s1 + $0x608] sm:$0xff]
  %v221 = vld [vmem:[%s1 + $0x610] sm:$0xff]
  %v222 = vld [vmem:[%s1 + $0x618] sm:$0xff]
  %v223 = vld [vmem:[%s1 + $0x620] sm:$0xff]
  %v224 = vld [vmem:[%s1 + $0x628] sm:$0xff]
  %v225 = vld [vmem:[%s1 + $0x630] sm:$0xff]
  %v226 = vld [vmem:[%s1 + $0x638] sm:$0xff]
  %v227 = vld [vmem:[%s1 + $0x640] sm:$0xff]
  %v228 = vld [vmem:[%s1 + $0x648] sm:$0xff]
  %v229 = vld [vmem:[%s1 + $0x650] sm:$0xff]
  %v230 = vld [vmem:[%s1 + $0x658] sm:$0xff]
  %v231 = vld [vmem:[%s1 + $0x660] sm:$0xff]
  %v232 = vld [vmem:[%s1 + $0x668] sm:$0xff]
  %v233 = vld [vmem:[%s1 + $0x670] sm:$0xff]
  %v234 = vld [vmem:[%s1 + $0x678] sm:$0xff]
  %v235 = vld [vmem:[%s1 + $0x680] sm:$0xff]
  %v236 = vld [vmem:[%s1 + $0x688] sm:$0xff]
  %v237 = vld [vmem:[%s1 + $0x690] sm:$0xff]
  %v238 = vld [vmem:[%s1 + $0x698] sm:$0xff]
  %v239 = vld [vmem:[%s1 + $0x6a0] sm:$0xff]
  %v240 = vld [vmem:[%s1 + $0x6a8] sm:$0xff]
  %v241 = vld [vmem:[%s1 + $0x6b0] sm:$0xff]
  %v242 = vld [vmem:[%s1 + $0x6b8] sm:$0xff]
  %v243 = vld [vmem:[%s1 + $0x6c0] sm:$0xff]
  %v244 = vld [vmem:[%s1 + $0x6c8] sm:$0xff]
  %v245 = vld [vmem:[%s1 + $0x6d0] sm:$0xff]
  %v246 = vld [vmem:[%s1 + $0x6d8] sm:$0xff]
  %v247 = vld [vmem:[%s1 + $0x6e0] sm:$0xff]
  %v248 = vld [vmem:[%s1 + $0x6e8] sm:$0xff]
  %v249 = vld [vmem:[%s1 + $0x6f0] sm:$0xff]
  %v250 = vld [vmem:[%s1 + $0x6f8] sm:$0xff]
  %v251 = vld [vmem:[%s1 + $0x700] sm:$0xff]
  %v252 = vld [vmem:[%s1 + $0x708] sm:$0xff]
  %v253 = vld [vmem:[%s1 + $0x710] sm:$0xff]
  %v254 = vld [vmem:[%s1 + $0x718] sm:$0xff]
  %v255 = vld [vmem:[%s1 + $0x720] sm:$0xff]
  %v256 = vld [vmem:[%s1 + $0x728] sm:$0xff]
  %v257 = vld [vmem:[%s1 + $0x730] sm:$0xff]
  %v258 = vld [vmem:[%s1 + $0x738] sm:$0xff]
  %v259 = vld [vmem:[%s1 + $0x740] sm:$0xff]
  %v260 = vld [vmem:[%s1 + $0x748] sm:$0xff]
  %v261 = vld [vmem:[%s1 + $0x750] sm:$0xff]
  %v262 = vld [vmem:[%s1 + $0x758] sm:$0xff]
  %v263 = vld [vmem:[%s1 + $0x760] sm:$0xff]
  %v264 = vld [vmem:[%s1 + $0x768] sm:$0xff]
  %v265 = vld [vmem:[%s1 + $0x770] sm:$0xff]
  %v266 = vld [vmem:[%s1 + $0x778] sm:$0xff]
  %v267 = vld [vmem:[%s1 + $0x780] sm:$0xff]
  %v268 = vld [vmem:[%s1 + $0x788] sm:$0xff]
  %v269 = vld [vmem:[%s1 + $0x790] sm:$0xff]
  %v270 = vld [vmem:[%s1 + $0x798] sm:$0xff]
  %v271 = vld [vmem:[%s1 + $0x7a0] sm:$0xff]
  %v272 = vld [vmem:[%s1 + $0x7a8] sm:$0xff]
  %v273 = vld [vmem:[%s1 + $0x7b0] sm:$0xff]
  %v274 = vld [vmem:[%s1 + $0x7b8] sm:$0xff]
  %v275 = vld [vmem:[%s1 + $0x7c0] sm:$0xff]
  %v276 = vld [vmem:[%s1 + $0x7c8] sm:$0xff]
  %v277 = vld [vmem:[%s1 + $0x7d0] sm:$0xff]
  %v278 = vld [vmem:[%s1 + $0x7d8] sm:$0xff]
  %v279 = vld [vmem:[%s1 + $0x7e0] sm:$0xff]
  %v280 = vld [vmem:[%s1 + $0x7e8] sm:$0xff]
  %v281 = vld [vmem:[%s1 + $0x7f0] sm:$0xff]
  %v282 = vld [vmem:[%s1 + $0x7f8] sm:$0xff]
  %283 = vmatprep.subr.mxu0 0.0
  %284 = vmatpush1.msra.mxu0 %v42
  %285 = vmatprep.subr.mxu0 0.0
  %286 = vmatpush1.msra.mxu0 %v41
  %287 = vmatprep.subr.mxu0 0.0
  %288 = vmatpush1.msra.mxu0 %v40
  %289 = vmatprep.subr.mxu0 0.0
  %290 = vmatpush1.msra.mxu0 %v39
  %291 = vmatprep.subr.mxu0 0.0
  %292 = vmatpush1.msra.mxu0 %v38
  %293 = vmatprep.subr.mxu0 0.0
  %294 = vmatpush1.msra.mxu0 %v37
  %295 = vmatprep.subr.mxu0 0.0
  %296 = vmatpush1.msra.mxu0 %v36
  %297 = vmatprep.subr.mxu0 0.0
  %298 = vmatpush1.msra.mxu0 %v35
  %299 = vmatprep.subr.mxu0 0.0
  %300 = vmatpush1.msra.mxu0 %v34
  %301 = vmatprep.subr.mxu0 0.0
  %302 = vmatpush1.msra.mxu0 %v33
  %303 = vmatprep.subr.mxu0 0.0
  %304 = vmatpush1.msra.mxu0 %v32
  %305 = vmatprep.subr.mxu0 0.0
  %306 = vmatpush1.msra.mxu0 %v31
  %307 = vmatprep.subr.mxu0 0.0
  %308 = vmatpush1.msra.mxu0 %v30
  %309 = vmatprep.subr.mxu0 0.0
  %310 = vmatpush1.msra.mxu0 %v29
  %311 = vmatprep.subr.mxu0 0.0
  %312 = vmatpush1.msra.mxu0 %v28
  %313 = vmatprep.subr.mxu0 0.0
  %314 = vmatpush1.msra.mxu0 %v27
  %315 = vmatprep.subr.mxu0 0.0
  %316 = vmatpush2.msra.mxu0 %v58
  %317 = vmatprep.subr.mxu0 0.0
  %318 = vmatpush2.msra.mxu0 %v57
  %319 = vmatprep.subr.mxu0 0.0
  %320 = vmatpush2.msra.mxu0 %v56
  %321 = vmatprep.subr.mxu0 0.0
  %322 = vmatpush2.msra.mxu0 %v55
  %323 = vmatprep.subr.mxu0 0.0
  %324 = vmatpush2.msra.mxu0 %v54
  %325 = vmatprep.subr.mxu0 0.0
  %326 = vmatpush2.msra.mxu0 %v53
  %327 = vmatprep.subr.mxu0 0.0
  %328 = vmatpush2.msra.mxu0 %v52
  %329 = vmatprep.subr.mxu0 0.0
  %330 = vmatpush2.msra.mxu0 %v51
  %331 = vmatprep.subr.mxu0 0.0
  %332 = vmatpush2.msra.mxu0 %v50
  %333 = vmatprep.subr.mxu0 0.0
  %334 = vmatpush2.msra.mxu0 %v49
  %335 = vmatprep.subr.mxu0 0.0
  %336 = vmatpush2.msra.mxu0 %v48
  %337 = vmatprep.subr.mxu0 0.0
  %338 = vmatpush2.msra.mxu0 %v47
  %339 = vmatprep.subr.mxu0 0.0
  %340 = vmatpush2.msra.mxu0 %v46
  %341 = vmatprep.subr.mxu0 0.0
  %342 = vmatpush2.msra.mxu0 %v45
  %343 = vmatprep.subr.mxu0 0.0
  %344 = vmatpush2.msra.mxu0 %v44
  %345 = vmatprep.subr.mxu0 0.0
  %346 = vmatpush2.msra.mxu0 %v43
  %347 = vmatprep.mubr.f32.mxu0 %v12
  %348 = vmatmul.mubr.f32.gmra.mxu0 %v11
  %v349 = vpop.f32.mrf.mxu0
  %v350 = vadd.f32 0.0, %v349
  %v351 = vpop.f32.mrf.mxu0
  %352 = vdwg.mxu0
  %353 = vmatprep.subr.mxu0 0.0
  %354 = vmatpush1.msra.mxu0 %v74
  %355 = vmatprep.subr.mxu0 0.0
  %356 = vmatpush1.msra.mxu0 %v73
  %357 = vmatprep.subr.mxu0 0.0
  %358 = vmatpush1.msra.mxu0 %v72
  %359 = vmatprep.subr.mxu0 0.0
  %360 = vmatpush1.msra.mxu0 %v71
  %361 = vmatprep.subr.mxu0 0.0
  %362 = vmatpush1.msra.mxu0 %v70
  %363 = vmatprep.subr.mxu0 0.0
  %364 = vmatpush1.msra.mxu0 %v69
  %365 = vmatprep.subr.mxu0 0.0
  %366 = vmatpush1.msra.mxu0 %v68
  %367 = vmatprep.subr.mxu0 0.0
  %368 = vmatpush1.msra.mxu0 %v67
  %369 = vmatprep.subr.mxu0 0.0
  %370 = vmatpush1.msra.mxu0 %v66
  %371 = vmatprep.subr.mxu0 0.0
  %372 = vmatpush1.msra.mxu0 %v65
  %373 = vmatprep.subr.mxu0 0.0
  %374 = vmatpush1.msra.mxu0 %v64
  %375 = vmatprep.subr.mxu0 0.0
  %376 = vmatpush1.msra.mxu0 %v63
  %377 = vmatprep.subr.mxu0 0.0
  %378 = vmatpush1.msra.mxu0 %v62
  %379 = vmatprep.subr.mxu0 0.0
  %380 = vmatpush1.msra.mxu0 %v61
  %381 = vmatprep.subr.mxu0 0.0
  %382 = vmatpush1.msra.mxu0 %v60
  %383 = vmatprep.subr.mxu0 0.0
  %384 = vmatpush1.msra.mxu0 %v59
  %385 = vmatprep.subr.mxu0 0.0
  %386 = vmatpush2.msra.mxu0 %v90
  %387 = vmatprep.subr.mxu0 0.0
  %388 = vmatpush2.msra.mxu0 %v89
  %389 = vmatprep.subr.mxu0 0.0
  %390 = vmatpush2.msra.mxu0 %v88
  %391 = vmatprep.subr.mxu0 0.0
  %392 = vmatpush2.msra.mxu0 %v87
  %393 = vmatprep.subr.mxu0 0.0
  %394 = vmatpush2.msra.mxu0 %v86
  %395 = vmatprep.subr.mxu0 0.0
  %396 = vmatpush2.msra.mxu0 %v85
  %397 = vmatprep.subr.mxu0 0.0
  %398 = vmatpush2.msra.mxu0 %v84
  %399 = vmatprep.subr.mxu0 0.0
  %400 = vmatpush2.msra.mxu0 %v83
  %401 = vmatprep.subr.mxu0 0.0
  %402 = vmatpush2.msra.mxu0 %v82
  %403 = vmatprep.subr.mxu0 0.0
  %404 = vmatpush2.msra.mxu0 %v81
  %405 = vmatprep.subr.mxu0 0.0
  %406 = vmatpush2.msra.mxu0 %v80
  %407 = vmatprep.subr.mxu0 0.0
  %408 = vmatpush2.msra.mxu0 %v79
  %409 = vmatprep.subr.mxu0 0.0
  %410 = vmatpush2.msra.mxu0 %v78
  %411 = vmatprep.subr.mxu0 0.0
  %412 = vmatpush2.msra.mxu0 %v77
  %413 = vmatprep.subr.mxu0 0.0
  %414 = vmatpush2.msra.mxu0 %v76
  %415 = vmatprep.subr.mxu0 0.0
  %416 = vmatpush2.msra.mxu0 %v75
  %417 = vmatprep.mubr.f32.mxu0 %v14
  %418 = vmatmul.mubr.f32.gmra.mxu0 %v13
  %v419 = vpop.f32.mrf.mxu0
  %v420 = vadd.f32 %v350, %v419
  %v421 = vpop.f32.mrf.mxu0
  %422 = vdwg.mxu0
  %423 = vmatprep.subr.mxu0 0.0
  %424 = vmatpush1.msra.mxu0 %v106
  %425 = vmatprep.subr.mxu0 0.0
  %426 = vmatpush1.msra.mxu0 %v105
  %427 = vmatprep.subr.mxu0 0.0
  %428 = vmatpush1.msra.mxu0 %v104
  %429 = vmatprep.subr.mxu0 0.0
  %430 = vmatpush1.msra.mxu0 %v103
  %431 = vmatprep.subr.mxu0 0.0
  %432 = vmatpush1.msra.mxu0 %v102
  %433 = vmatprep.subr.mxu0 0.0
  %434 = vmatpush1.msra.mxu0 %v101
  %435 = vmatprep.subr.mxu0 0.0
  %436 = vmatpush1.msra.mxu0 %v100
  %437 = vmatprep.subr.mxu0 0.0
  %438 = vmatpush1.msra.mxu0 %v99
  %439 = vmatprep.subr.mxu0 0.0
  %440 = vmatpush1.msra.mxu0 %v98
  %441 = vmatprep.subr.mxu0 0.0
  %442 = vmatpush1.msra.mxu0 %v97
  %443 = vmatprep.subr.mxu0 0.0
  %444 = vmatpush1.msra.mxu0 %v96
  %445 = vmatprep.subr.mxu0 0.0
  %446 = vmatpush1.msra.mxu0 %v95
  %447 = vmatprep.subr.mxu0 0.0
  %448 = vmatpush1.msra.mxu0 %v94
  %449 = vmatprep.subr.mxu0 0.0
  %450 = vmatpush1.msra.mxu0 %v93
  %451 = vmatprep.subr.mxu0 0.0
  %452 = vmatpush1.msra.mxu0 %v92
  %453 = vmatprep.subr.mxu0 0.0
  %454 = vmatpush1.msra.mxu0 %v91
  %455 = vmatprep.subr.mxu0 0.0
  %456 = vmatpush2.msra.mxu0 %v122
  %457 = vmatprep.subr.mxu0 0.0
  %458 = vmatpush2.msra.mxu0 %v121
  %459 = vmatprep.subr.mxu0 0.0
  %460 = vmatpush2.msra.mxu0 %v120
  %461 = vmatprep.subr.mxu0 0.0
  %462 = vmatpush2.msra.mxu0 %v119
  %463 = vmatprep.subr.mxu0 0.0
  %464 = vmatpush2.msra.mxu0 %v118
  %465 = vmatprep.subr.mxu0 0.0
  %466 = vmatpush2.msra.mxu0 %v117
  %467 = vmatprep.subr.mxu0 0.0
  %468 = vmatpush2.msra.mxu0 %v116
  %469 = vmatprep.subr.mxu0 0.0
  %470 = vmatpush2.msra.mxu0 %v115
  %471 = vmatprep.subr.mxu0 0.0
  %472 = vmatpush2.msra.mxu0 %v114
  %473 = vmatprep.subr.mxu0 0.0
  %474 = vmatpush2.msra.mxu0 %v113
  %475 = vmatprep.subr.mxu0 0.0
  %476 = vmatpush2.msra.mxu0 %v112
  %477 = vmatprep.subr.mxu0 0.0
  %478 = vmatpush2.msra.mxu0 %v111
  %479 = vmatprep.subr.mxu0 0.0
  %480 = vmatpush2.msra.mxu0 %v110
  %481 = vmatprep.subr.mxu0 0.0
  %482 = vmatpush2.msra.mxu0 %v109
  %483 = vmatprep.subr.mxu0 0.0
  %484 = vmatpush2.msra.mxu0 %v108
  %485 = vmatprep.subr.mxu0 0.0
  %486 = vmatpush2.msra.mxu0 %v107
  %487 = vmatprep.mubr.f32.mxu0 %v16
  %488 = vmatmul.mubr.f32.gmra.mxu0 %v15
  %v489 = vpop.f32.mrf.mxu0
  %v490 = vadd.f32 %v420, %v489
  %v491 = vpop.f32.mrf.mxu0
  %492 = vdwg.mxu0
  %493 = vmatprep.subr.mxu0 0.0
  %494 = vmatpush1.msra.mxu0 %v138
  %495 = vmatprep.subr.mxu0 0.0
  %496 = vmatpush1.msra.mxu0 %v137
  %497 = vmatprep.subr.mxu0 0.0
  %498 = vmatpush1.msra.mxu0 %v136
  %499 = vmatprep.subr.mxu0 0.0
  %500 = vmatpush1.msra.mxu0 %v135
  %501 = vmatprep.subr.mxu0 0.0
  %502 = vmatpush1.msra.mxu0 %v134
  %503 = vmatprep.subr.mxu0 0.0
  %504 = vmatpush1.msra.mxu0 %v133
  %505 = vmatprep.subr.mxu0 0.0
  %506 = vmatpush1.msra.mxu0 %v132
  %507 = vmatprep.subr.mxu0 0.0
  %508 = vmatpush1.msra.mxu0 %v131
  %509 = vmatprep.subr.mxu0 0.0
  %510 = vmatpush1.msra.mxu0 %v130
  %511 = vmatprep.subr.mxu0 0.0
  %512 = vmatpush1.msra.mxu0 %v129
  %513 = vmatprep.subr.mxu0 0.0
  %514 = vmatpush1.msra.mxu0 %v128
  %515 = vmatprep.subr.mxu0 0.0
  %516 = vmatpush1.msra.mxu0 %v127
  %517 = vmatprep.subr.mxu0 0.0
  %518 = vmatpush1.msra.mxu0 %v126
  %519 = vmatprep.subr.mxu0 0.0
  %520 = vmatpush1.msra.mxu0 %v125
  %521 = vmatprep.subr.mxu0 0.0
  %522 = vmatpush1.msra.mxu0 %v124
  %523 = vmatprep.subr.mxu0 0.0
  %524 = vmatpush1.msra.mxu0 %v123
  %525 = vmatprep.subr.mxu0 0.0
  %526 = vmatpush2.msra.mxu0 %v154
  %527 = vmatprep.subr.mxu0 0.0
  %528 = vmatpush2.msra.mxu0 %v153
  %529 = vmatprep.subr.mxu0 0.0
  %530 = vmatpush2.msra.mxu0 %v152
  %531 = vmatprep.subr.mxu0 0.0
  %532 = vmatpush2.msra.mxu0 %v151
  %533 = vmatprep.subr.mxu0 0.0
  %534 = vmatpush2.msra.mxu0 %v150
  %535 = vmatprep.subr.mxu0 0.0
  %536 = vmatpush2.msra.mxu0 %v149
  %537 = vmatprep.subr.mxu0 0.0
  %538 = vmatpush2.msra.mxu0 %v148
  %539 = vmatprep.subr.mxu0 0.0
  %540 = vmatpush2.msra.mxu0 %v147
  %541 = vmatprep.subr.mxu0 0.0
  %542 = vmatpush2.msra.mxu0 %v146
  %543 = vmatprep.subr.mxu0 0.0
  %544 = vmatpush2.msra.mxu0 %v145
  %545 = vmatprep.subr.mxu0 0.0
  %546 = vmatpush2.msra.mxu0 %v144
  %547 = vmatprep.subr.mxu0 0.0
  %548 = vmatpush2.msra.mxu0 %v143
  %549 = vmatprep.subr.mxu0 0.0
  %550 = vmatpush2.msra.mxu0 %v142
  %551 = vmatprep.subr.mxu0 0.0
  %552 = vmatpush2.msra.mxu0 %v141
  %553 = vmatprep.subr.mxu0 0.0
  %554 = vmatpush2.msra.mxu0 %v140
  %555 = vmatprep.subr.mxu0 0.0
  %556 = vmatpush2.msra.mxu0 %v139
  %557 = vmatprep.mubr.f32.mxu0 %v18
  %558 = vmatmul.mubr.f32.gmra.mxu0 %v17
  %v559 = vpop.f32.mrf.mxu0
  %v560 = vadd.f32 %v490, %v559
  %v561 = vpop.f32.mrf.mxu0
  %562 = vdwg.mxu0
  %563 = vmatprep.subr.mxu0 0.0
  %564 = vmatpush1.msra.mxu0 %v170
  %565 = vmatprep.subr.mxu0 0.0
  %566 = vmatpush1.msra.mxu0 %v169
  %567 = vmatprep.subr.mxu0 0.0
  %568 = vmatpush1.msra.mxu0 %v168
  %569 = vmatprep.subr.mxu0 0.0
  %570 = vmatpush1.msra.mxu0 %v167
  %571 = vmatprep.subr.mxu0 0.0
  %572 = vmatpush1.msra.mxu0 %v166
  %573 = vmatprep.subr.mxu0 0.0
  %574 = vmatpush1.msra.mxu0 %v165
  %575 = vmatprep.subr.mxu0 0.0
  %576 = vmatpush1.msra.mxu0 %v164
  %577 = vmatprep.subr.mxu0 0.0
  %578 = vmatpush1.msra.mxu0 %v163
  %579 = vmatprep.subr.mxu0 0.0
  %580 = vmatpush1.msra.mxu0 %v162
  %581 = vmatprep.subr.mxu0 0.0
  %582 = vmatpush1.msra.mxu0 %v161
  %583 = vmatprep.subr.mxu0 0.0
  %584 = vmatpush1.msra.mxu0 %v160
  %585 = vmatprep.subr.mxu0 0.0
  %586 = vmatpush1.msra.mxu0 %v159
  %587 = vmatprep.subr.mxu0 0.0
  %588 = vmatpush1.msra.mxu0 %v158
  %589 = vmatprep.subr.mxu0 0.0
  %590 = vmatpush1.msra.mxu0 %v157
  %591 = vmatprep.subr.mxu0 0.0
  %592 = vmatpush1.msra.mxu0 %v156
  %593 = vmatprep.subr.mxu0 0.0
  %594 = vmatpush1.msra.mxu0 %v155
  %595 = vmatprep.subr.mxu0 0.0
  %596 = vmatpush2.msra.mxu0 %v186
  %597 = vmatprep.subr.mxu0 0.0
  %598 = vmatpush2.msra.mxu0 %v185
  %599 = vmatprep.subr.mxu0 0.0
  %600 = vmatpush2.msra.mxu0 %v184
  %601 = vmatprep.subr.mxu0 0.0
  %602 = vmatpush2.msra.mxu0 %v183
  %603 = vmatprep.subr.mxu0 0.0
  %604 = vmatpush2.msra.mxu0 %v182
  %605 = vmatprep.subr.mxu0 0.0
  %606 = vmatpush2.msra.mxu0 %v181
  %607 = vmatprep.subr.mxu0 0.0
  %608 = vmatpush2.msra.mxu0 %v180
  %609 = vmatprep.subr.mxu0 0.0
  %610 = vmatpush2.msra.mxu0 %v179
  %611 = vmatprep.subr.mxu0 0.0
  %612 = vmatpush2.msra.mxu0 %v178
  %613 = vmatprep.subr.mxu0 0.0
  %614 = vmatpush2.msra.mxu0 %v177
  %615 = vmatprep.subr.mxu0 0.0
  %616 = vmatpush2.msra.mxu0 %v176
  %617 = vmatprep.subr.mxu0 0.0
  %618 = vmatpush2.msra.mxu0 %v175
  %619 = vmatprep.subr.mxu0 0.0
  %620 = vmatpush2.msra.mxu0 %v174
  %621 = vmatprep.subr.mxu0 0.0
  %622 = vmatpush2.msra.mxu0 %v173
  %623 = vmatprep.subr.mxu0 0.0
  %624 = vmatpush2.msra.mxu0 %v172
  %625 = vmatprep.subr.mxu0 0.0
  %626 = vmatpush2.msra.mxu0 %v171
  %627 = vmatprep.mubr.f32.mxu0 %v20
  %628 = vmatmul.mubr.f32.gmra.mxu0 %v19
  %v629 = vpop.f32.mrf.mxu0
  %v630 = vadd.f32 %v560, %v629
  %v631 = vpop.f32.mrf.mxu0
  %632 = vdwg.mxu0
  %633 = vmatprep.subr.mxu0 0.0
  %634 = vmatpush1.msra.mxu0 %v202
  %635 = vmatprep.subr.mxu0 0.0
  %636 = vmatpush1.msra.mxu0 %v201
  %637 = vmatprep.subr.mxu0 0.0
  %638 = vmatpush1.msra.mxu0 %v200
  %639 = vmatprep.subr.mxu0 0.0
  %640 = vmatpush1.msra.mxu0 %v199
  %641 = vmatprep.subr.mxu0 0.0
  %642 = vmatpush1.msra.mxu0 %v198
  %643 = vmatprep.subr.mxu0 0.0
  %644 = vmatpush1.msra.mxu0 %v197
  %645 = vmatprep.subr.mxu0 0.0
  %646 = vmatpush1.msra.mxu0 %v196
  %647 = vmatprep.subr.mxu0 0.0
  %648 = vmatpush1.msra.mxu0 %v195
  %649 = vmatprep.subr.mxu0 0.0
  %650 = vmatpush1.msra.mxu0 %v194
  %651 = vmatprep.subr.mxu0 0.0
  %652 = vmatpush1.msra.mxu0 %v193
  %653 = vmatprep.subr.mxu0 0.0
  %654 = vmatpush1.msra.mxu0 %v192
  %655 = vmatprep.subr.mxu0 0.0
  %656 = vmatpush1.msra.mxu0 %v191
  %657 = vmatprep.subr.mxu0 0.0
  %658 = vmatpush1.msra.mxu0 %v190
  %659 = vmatprep.subr.mxu0 0.0
  %660 = vmatpush1.msra.mxu0 %v189
  %661 = vmatprep.subr.mxu0 0.0
  %662 = vmatpush1.msra.mxu0 %v188
  %663 = vmatprep.subr.mxu0 0.0
  %664 = vmatpush1.msra.mxu0 %v187
  %665 = vmatprep.subr.mxu0 0.0
  %666 = vmatpush2.msra.mxu0 %v218
  %667 = vmatprep.subr.mxu0 0.0
  %668 = vmatpush2.msra.mxu0 %v217
  %669 = vmatprep.subr.mxu0 0.0
  %670 = vmatpush2.msra.mxu0 %v216
  %671 = vmatprep.subr.mxu0 0.0
  %672 = vmatpush2.msra.mxu0 %v215
  %673 = vmatprep.subr.mxu0 0.0
  %674 = vmatpush2.msra.mxu0 %v214
  %675 = vmatprep.subr.mxu0 0.0
  %676 = vmatpush2.msra.mxu0 %v213
  %677 = vmatprep.subr.mxu0 0.0
  %678 = vmatpush2.msra.mxu0 %v212
  %679 = vmatprep.subr.mxu0 0.0
  %680 = vmatpush2.msra.mxu0 %v211
  %681 = vmatprep.subr.mxu0 0.0
  %682 = vmatpush2.msra.mxu0 %v210
  %683 = vmatprep.subr.mxu0 0.0
  %684 = vmatpush2.msra.mxu0 %v209
  %685 = vmatprep.subr.mxu0 0.0
  %686 = vmatpush2.msra.mxu0 %v208
  %687 = vmatprep.subr.mxu0 0.0
  %688 = vmatpush2.msra.mxu0 %v207
  %689 = vmatprep.subr.mxu0 0.0
  %690 = vmatpush2.msra.mxu0 %v206
  %691 = vmatprep.subr.mxu0 0.0
  %692 = vmatpush2.msra.mxu0 %v205
  %693 = vmatprep.subr.mxu0 0.0
  %694 = vmatpush2.msra.mxu0 %v204
  %695 = vmatprep.subr.mxu0 0.0
  %696 = vmatpush2.msra.mxu0 %v203
  %697 = vmatprep.mubr.f32.mxu0 %v22
  %698 = vmatmul.mubr.f32.gmra.mxu0 %v21
  %v699 = vpop.f32.mrf.mxu0
  %v700 = vadd.f32 %v630, %v699
  %v701 = vpop.f32.mrf.mxu0
  %702 = vdwg.mxu0
  %703 = vmatprep.subr.mxu0 0.0
  %704 = vmatpush1.msra.mxu0 %v234
  %705 = vmatprep.subr.mxu0 0.0
  %706 = vmatpush1.msra.mxu0 %v233
  %707 = vmatprep.subr.mxu0 0.0
  %708 = vmatpush1.msra.mxu0 %v232
  %709 = vmatprep.subr.mxu0 0.0
  %710 = vmatpush1.msra.mxu0 %v231
  %711 = vmatprep.subr.mxu0 0.0
  %712 = vmatpush1.msra.mxu0 %v230
  %713 = vmatprep.subr.mxu0 0.0
  %714 = vmatpush1.msra.mxu0 %v229
  %715 = vmatprep.subr.mxu0 0.0
  %716 = vmatpush1.msra.mxu0 %v228
  %717 = vmatprep.subr.mxu0 0.0
  %718 = vmatpush1.msra.mxu0 %v227
  %719 = vmatprep.subr.mxu0 0.0
  %720 = vmatpush1.msra.mxu0 %v226
  %721 = vmatprep.subr.mxu0 0.0
  %722 = vmatpush1.msra.mxu0 %v225
  %723 = vmatprep.subr.mxu0 0.0
  %724 = vmatpush1.msra.mxu0 %v224
  %725 = vmatprep.subr.mxu0 0.0
  %726 = vmatpush1.msra.mxu0 %v223
  %727 = vmatprep.subr.mxu0 0.0
  %728 = vmatpush1.msra.mxu0 %v222
  %729 = vmatprep.subr.mxu0 0.0
  %730 = vmatpush1.msra.mxu0 %v221
  %731 = vmatprep.subr.mxu0 0.0
  %732 = vmatpush1.msra.mxu0 %v220
  %733 = vmatprep.subr.mxu0 0.0
  %734 = vmatpush1.msra.mxu0 %v219
  %735 = vmatprep.subr.mxu0 0.0
  %736 = vmatpush2.msra.mxu0 %v250
  %737 = vmatprep.subr.mxu0 0.0
  %738 = vmatpush2.msra.mxu0 %v249
  %739 = vmatprep.subr.mxu0 0.0
  %740 = vmatpush2.msra.mxu0 %v248
  %741 = vmatprep.subr.mxu0 0.0
  %742 = vmatpush2.msra.mxu0 %v247
  %743 = vmatprep.subr.mxu0 0.0
  %744 = vmatpush2.msra.mxu0 %v246
  %745 = vmatprep.subr.mxu0 0.0
  %746 = vmatpush2.msra.mxu0 %v245
  %747 = vmatprep.subr.mxu0 0.0
  %748 = vmatpush2.msra.mxu0 %v244
  %749 = vmatprep.subr.mxu0 0.0
  %750 = vmatpush2.msra.mxu0 %v243
  %751 = vmatprep.subr.mxu0 0.0
  %752 = vmatpush2.msra.mxu0 %v242
  %753 = vmatprep.subr.mxu0 0.0
  %754 = vmatpush2.msra.mxu0 %v241
  %755 = vmatprep.subr.mxu0 0.0
  %756 = vmatpush2.msra.mxu0 %v240
  %757 = vmatprep.subr.mxu0 0.0
  %758 = vmatpush2.msra.mxu0 %v239
  %759 = vmatprep.subr.mxu0 0.0
  %760 = vmatpush2.msra.mxu0 %v238
  %761 = vmatprep.subr.mxu0 0.0
  %762 = vmatpush2.msra.mxu0 %v237
  %763 = vmatprep.subr.mxu0 0.0
  %764 = vmatpush2.msra.mxu0 %v236
  %765 = vmatprep.subr.mxu0 0.0
  %766 = vmatpush2.msra.mxu0 %v235
  %767 = vmatprep.mubr.f32.mxu0 %v24
  %768 = vmatmul.mubr.f32.gmra.mxu0 %v23
  %v769 = vpop.f32.mrf.mxu0
  %v770 = vadd.f32 %v700, %v769
  %v771 = vpop.f32.mrf.mxu0
  %772 = vdwg.mxu0
  %773 = vmatprep.subr.mxu0 0.0
  %774 = vmatpush1.msra.mxu0 %v266
  %775 = vmatprep.subr.mxu0 0.0
  %776 = vmatpush1.msra.mxu0 %v265
  %777 = vmatprep.subr.mxu0 0.0
  %778 = vmatpush1.msra.mxu0 %v264
  %779 = vmatprep.subr.mxu0 0.0
  %780 = vmatpush1.msra.mxu0 %v263
  %781 = vmatprep.subr.mxu0 0.0
  %782 = vmatpush1.msra.mxu0 %v262
  %783 = vmatprep.subr.mxu0 0.0
  %784 = vmatpush1.msra.mxu0 %v261
  %785 = vmatprep.subr.mxu0 0.0
  %786 = vmatpush1.msra.mxu0 %v260
  %787 = vmatprep.subr.mxu0 0.0
  %788 = vmatpush1.msra.mxu0 %v259
  %789 = vmatprep.subr.mxu0 0.0
  %790 = vmatpush1.msra.mxu0 %v258
  %791 = vmatprep.subr.mxu0 0.0
  %792 = vmatpush1.msra.mxu0 %v257
  %793 = vmatprep.subr.mxu0 0.0
  %794 = vmatpush1.msra.mxu0 %v256
  %795 = vmatprep.subr.mxu0 0.0
  %796 = vmatpush1.msra.mxu0 %v255
  %797 = vmatprep.subr.mxu0 0.0
  %798 = vmatpush1.msra.mxu0 %v254
  %799 = vmatprep.subr.mxu0 0.0
  %800 = vmatpush1.msra.mxu0 %v253
  %801 = vmatprep.subr.mxu0 0.0
  %802 = vmatpush1.msra.mxu0 %v252
  %803 = vmatprep.subr.mxu0 0.0
  %804 = vmatpush1.msra.mxu0 %v251
  %805 = vmatprep.subr.mxu0 0.0
  %806 = vmatpush2.msra.mxu0 %v282
  %807 = vmatprep.subr.mxu0 0.0
  %808 = vmatpush2.msra.mxu0 %v281
  %809 = vmatprep.subr.mxu0 0.0
  %810 = vmatpush2.msra.mxu0 %v280
  %811 = vmatprep.subr.mxu0 0.0
  %812 = vmatpush2.msra.mxu0 %v279
  %813 = vmatprep.subr.mxu0 0.0
  %814 = vmatpush2.msra.mxu0 %v278
  %815 = vmatprep.subr.mxu0 0.0
  %816 = vmatpush2.msra.mxu0 %v277
  %817 = vmatprep.subr.mxu0 0.0
  %818 = vmatpush2.msra.mxu0 %v276
  %819 = vmatprep.subr.mxu0 0.0
  %820 = vmatpush2.msra.mxu0 %v275
  %821 = vmatprep.subr.mxu0 0.0
  %822 = vmatpush2.msra.mxu0 %v274
  %823 = vmatprep.subr.mxu0 0.0
  %824 = vmatpush2.msra.mxu0 %v273
  %825 = vmatprep.subr.mxu0 0.0
  %826 = vmatpush2.msra.mxu0 %v272
  %827 = vmatprep.subr.mxu0 0.0
  %828 = vmatpush2.msra.mxu0 %v271
  %829 = vmatprep.subr.mxu0 0.0
  %830 = vmatpush2.msra.mxu0 %v270
  %831 = vmatprep.subr.mxu0 0.0
  %832 = vmatpush2.msra.mxu0 %v269
  %833 = vmatprep.subr.mxu0 0.0
  %834 = vmatpush2.msra.mxu0 %v268
  %835 = vmatprep.subr.mxu0 0.0
  %836 = vmatpush2.msra.mxu0 %v267
  %837 = vmatprep.mubr.f32.mxu0 %v26
  %838 = vmatmul.mubr.f32.gmra.mxu0 %v25
  %v839 = vpop.f32.mrf.mxu0
  %v840 = vadd.f32 %v770, %v839
  %v841 = vpop.f32.mrf.mxu0
  %842 = vdwg.mxu0
  %v843 = vmul.f32 %v840, %v840
  %vm844 = vcmask 31744
  %v845 = vsel %vm844, %v843, 0.0
  %846 = vadd.xlane.f32.xlu0 %v845
  %v847 = vpop.xlane.xlu0 %846
  %v848 = vlaneseq
  %v849 = vand.u32 %v848, 127
  %vm850 = vcmp.eq.s32.totalorder %v849, 0
  %v851 = vsub.f32 1.0, %v847
  %v852 = vsel %vm850, %v847, %v851
  %vm853 = vcmask 15360
  %854 = vst.msk [vmem:[%s2] sm:$0xff] %vm853, %v852
  // Predicated region
  $region10: #{net_forward.1} parent=0 // pred_check
    _
  $region11: #{net_forward.1} parent=0 // pred_check_branch
    %856 = sbr.rel (0) target = $region13
  $region12: #{net_forward.1} parent=0 // pred_region
    _
  $region13: #{net_forward.1} parent=0 // pred_fallthru
    _
  // Predicated region
  $region14: #{net_forward.1} parent=0 // pred_check
    _
  $region15: #{net_forward.1} parent=0 // pred_check_branch
    %858 = sbr.rel (0) target = $region17
  $region16: #{net_forward.1} parent=0 // pred_region
    _
  $region17: #{net_forward.1} parent=0 // pred_fallthru
    _

</llo_original>
